<compile_context>
chip_gen: v6e
topology: v6e:2x2x1
jax: 0.10.0
libtpu: 0.0.40
codegen_flags: <defaults>
</compile_context>

<pallas_src>
import functools

import jax
import jax.numpy as jnp
from jax.experimental import pallas as pl
from jax.experimental.pallas import tpu as pltpu


def _edge_attn_kernel(dec_ref, enc_ref, w_enc_ref, w_dec_ref, out_ref, *, precision):
    """One (batch, hw-tile) block of: out = dec * sigmoid(W_e@enc + W_d@dec).

    dec_ref:   [1, Cd, tile_hw]  VMEM
    enc_ref:   [1, Ce, tile_hw]  VMEM
    w_enc_ref: [Cd, Ce]          VMEM (full, resident across grid)
    w_dec_ref: [Cd, Cd]          VMEM (full, resident across grid)
    out_ref:   [1, Cd, tile_hw]  VMEM (lane-dense last dim)
    """
    dec = dec_ref[0]            # [Cd, tile_hw]
    enc = enc_ref[0]            # [Ce, tile_hw]
    attn = jnp.dot(w_enc_ref[...], enc,
                   preferred_element_type=jnp.float32, precision=precision)
    attn = attn + jnp.dot(w_dec_ref[...], dec,
                          preferred_element_type=jnp.float32, precision=precision)
    gate = jax.nn.sigmoid(attn)                     # f32, runs on the EUP
    # Multiply in the decoder dtype: bf16 stays bf16 on v6e/v7x (native bf16 VPU),
    # f32 stays f32; on v5e the compiler upcasts bf16 as needed.
    out_ref[0] = (dec * gate.astype(dec.dtype)).astype(out_ref.dtype)


def _physical_vmem_bytes():
    """Per-core physical VMEM, with a conservative fallback (v7x per-TC = 64 MiB)."""
    try:
        info = pltpu.get_tpu_info()
        v = getattr(info, "vmem_capacity_bytes", None)
        if v:
            return int(v)
    except Exception:
        pass
    return 64 * 1024 * 1024


def _round_down_128(x):
    return (x // 128) * 128


def _ceil_div(a, b):
    return -(-a // b)


def edge_attention_block(dec_feat, enc_feat, w_conv_enc, w_conv_dec,
                         *, tile_hw=None, precision=None):
    """Pallas implementation of EdgeAttentionBlock.forward (bias=False convs).

    dec_feat:   [B, dec_ch, H, W]        (NCHW, like PyTorch)
    enc_feat:   [B, enc_ch, H_e, W_e]    (NCHW)
    w_conv_enc: [dec_ch, enc_ch, 1, 1]   (PyTorch Conv2d weight layout)
    w_conv_dec: [dec_ch, dec_ch, 1, 1]
    tile_hw:    optional user override of the spatial tile (columns); default =
                VMEM-derived maximum.
    precision:  optional matmul precision (pass jax.lax.Precision.HIGHEST for
                bit-level parity with the PyTorch f32 conv; MXU has huge slack).
    returns:    [B, dec_ch, H, W]
    """
    B, Cd, H, W = dec_feat.shape
    Ce = enc_feat.shape[1]
    HW = H * W

    # Bilinear resize glue (matches F.interpolate(mode='bilinear', align_corners=False)).
    if enc_feat.shape[-2:] != (H, W):
        enc_feat = jax.image.resize(
            enc_feat.astype(jnp.float32), (B, Ce, H, W),
            method="bilinear", antialias=False,
        ).astype(enc_feat.dtype)

    # 1x1 conv weights -> [Cout, Cin] matrices applied as W @ x[Cin, hw].
    w_enc = w_conv_enc[:, :, 0, 0]  # [Cd, Ce]
    w_dec = w_conv_dec[:, :, 0, 0]  # [Cd, Cd]

    # NCHW -> [B, C, HW]; channels in sublane, spatial in lane. No transposes.
    dec3 = dec_feat.reshape(B, Cd, HW)
    enc3 = enc_feat.reshape(B, Ce, HW)

    # --- generation-aware VMEM budget & tile sizing --------------------------
    dec_isz = jnp.dtype(dec3.dtype).itemsize
    enc_isz = jnp.dtype(enc3.dtype).itemsize
    w_isz = jnp.dtype(w_enc.dtype).itemsize

    vmem_phys = _physical_vmem_bytes()
    # Double-buffered tiles + weights use ~40% of physical VMEM, capped at 40 MiB:
    # ~25 MiB on v7x (64 MiB physical), 40 MiB on v5e/v6e (128 MiB physical).
    budget = int(min(max(vmem_phys * 2 // 5, 12 << 20), 40 << 20))

    weight_bytes = 2 * (Cd * Ce + Cd * Cd) * w_isz          # conservatively double-buffered
    bytes_per_col = 2 * Cd * dec_isz + Ce * enc_isz         # dec tile + out tile + enc tile
    avail = max(budget - weight_bytes, 2 * bytes_per_col * 128)
    max_cols = max(128, _round_down_128(avail // (2 * bytes_per_col)))

    if HW < 128:
        tile = HW                                            # full-extent block (tiny input)
    else:
        if tile_hw is None:
            tile = max_cols                                  # default: biggest tile that fits
        else:
            tile = max(128, _round_down_128(min(int(tile_hw), max_cols)))
        tile = min(tile, max(128, _round_down_128(HW)))      # 128-aligned; partial last block OK

        # Keep the v7x megacore fed: aim for >= 8 grid steps when the extent allows,
        # but never shrink below 512 columns (per-step overhead would dominate again).
        target_steps = 8
        if B * _ceil_div(HW, tile) < target_steps and HW > 256:
            cand = _ceil_div(HW, _ceil_div(target_steps, B))
            cand = max(512, _ceil_div(cand, 128) * 128)
            tile = max(128, min(tile, cand))

    grid = (B, _ceil_div(HW, tile))                          # partial last block OK (no padding)

    # Raise the scoped-VMEM limit above the per-generation default (v5e: 16 MiB),
    # while staying comfortably below physical capacity (v7x: 64 MiB).
    vmem_limit = int(min(max(vmem_phys - (4 << 20), budget), budget + (16 << 20)))

    kernel = functools.partial(_edge_attn_kernel, precision=precision)

    out3 = pl.pallas_call(
        kernel,
        out_shape=jax.ShapeDtypeStruct((B, Cd, HW), dec_feat.dtype),
        grid=grid,
        in_specs=[
            pl.BlockSpec((1, Cd, tile), lambda b, j: (b, 0, j)),   # dec tile
            pl.BlockSpec((1, Ce, tile), lambda b, j: (b, 0, j)),   # enc tile
            pl.BlockSpec((Cd, Ce), lambda b, j: (0, 0)),           # W_enc (resident)
            pl.BlockSpec((Cd, Cd), lambda b, j: (0, 0)),           # W_dec (resident)
        ],
        out_specs=pl.BlockSpec((1, Cd, tile), lambda b, j: (b, 0, j)),
        compiler_params=pltpu.CompilerParams(
            dimension_semantics=("parallel", "parallel"),
            vmem_limit_bytes=vmem_limit,
        ),
    )(dec3, enc3, w_enc, w_dec)

    return out3.reshape(B, Cd, H, W)


def _reference(dec_feat, enc_feat, w_conv_enc, w_conv_dec, precision=None):
    """Pure-JAX reference mirroring the PyTorch forward (for sanity check)."""
    B, Cd, H, W = dec_feat.shape
    Ce = enc_feat.shape[1]
    if enc_feat.shape[-2:] != (H, W):
        enc_feat = jax.image.resize(
            enc_feat.astype(jnp.float32), (B, Ce, H, W),
            method="bilinear", antialias=False,
        ).astype(enc_feat.dtype)
    w_enc = w_conv_enc[:, :, 0, 0]  # [Cd, Ce]
    w_dec = w_conv_dec[:, :, 0, 0]  # [Cd, Cd]
    attn = (jnp.einsum("bchw,oc->bohw", enc_feat, w_enc, precision=precision)
            + jnp.einsum("bchw,oc->bohw", dec_feat, w_dec, precision=precision))
    return dec_feat * jax.nn.sigmoid(attn)


if __name__ == "__main__":
    key = jax.random.PRNGKey(0)
    k_dec, k_enc, k_we, k_wd, k_dec2, k_enc2 = jax.random.split(key, 6)

    B, dec_ch, enc_ch, H, W = 2, 4, 8, 16, 16
    H_enc, W_enc = 8, 8  # exercises the bilinear-resize path (wrapper glue, not kernel)

    dec_feat = jax.random.normal(k_dec, (B, dec_ch, H, W), dtype=jnp.float32)
    enc_feat = jax.random.normal(k_enc, (B, enc_ch, H_enc, W_enc), dtype=jnp.float32)

    # Deterministic Conv2d weight init (kaiming-uniform-ish scale); bias=False
    # exactly as in the PyTorch module.
    bound_e = 1.0 / (enc_ch ** 0.5)
    bound_d = 1.0 / (dec_ch ** 0.5)
    w_conv_enc = jax.random.uniform(k_we, (dec_ch, enc_ch, 1, 1),
                                    minval=-bound_e, maxval=bound_e, dtype=jnp.float32)
    w_conv_dec = jax.random.uniform(k_wd, (dec_ch, dec_ch, 1, 1),
                                    minval=-bound_d, maxval=bound_d, dtype=jnp.float32)

    # --- check 1: canonical shapes + resize path ---------------------------
    out = edge_attention_block(dec_feat, enc_feat, w_conv_enc, w_conv_dec)
    out = jax.block_until_ready(out)
    ref = _reference(dec_feat, enc_feat, w_conv_enc, w_conv_dec)
    assert out.shape == (B, dec_ch, H, W)
    assert jnp.allclose(out, ref, atol=2e-5, rtol=2e-5), "mismatch vs reference (case 1)"

    # --- check 2: non-128-divisible H*W exercises the partial-last-block path
    H2, W2 = 10, 20  # H*W = 200 -> 128-wide tiles with a masked partial last block
    dec_feat2 = jax.random.normal(k_dec2, (B, dec_ch, H2, W2), dtype=jnp.float32)
    enc_feat2 = jax.random.normal(k_enc2, (B, enc_ch, H2, W2), dtype=jnp.float32)
    out2 = edge_attention_block(dec_feat2, enc_feat2, w_conv_enc, w_conv_dec)
    out2 = jax.block_until_ready(out2)
    ref2 = _reference(dec_feat2, enc_feat2, w_conv_enc, w_conv_dec)
    assert out2.shape == (B, dec_ch, H2, W2)
    assert jnp.allclose(out2, ref2, atol=2e-5, rtol=2e-5), "mismatch vs reference (case 2)"

    print("KERNEL_OK")
</pallas_src>

<mosaic_0001>
module attributes {stable_mosaic.version = 11 : i64} {
  func.func @_edge_attn_kernel(%arg0: i32, %arg1: i32, %arg2: memref<1x4x256xf32, #tpu.memory_space<vmem>>, %arg3: memref<1x8x256xf32, #tpu.memory_space<vmem>>, %arg4: memref<4x8xf32, #tpu.memory_space<vmem>>, %arg5: memref<4x4xf32, #tpu.memory_space<vmem>>, %arg6: memref<1x4x256xf32, #tpu.memory_space<vmem>>) attributes {dimension_semantics = [#tpu.dimension_semantics<parallel>, #tpu.dimension_semantics<parallel>], iteration_bounds = array<i64: 2, 1>, scalar_prefetch = 0 : i64, scratch_operands = 0 : i64, tpu.core_type = #tpu.core_type<tc>, window_params = [{transform_indices = @transform_0, window_bounds = array<i64: 1, 4, 256>}, {transform_indices = @transform_1, window_bounds = array<i64: 1, 8, 256>}, {pipeline_mode = #tpu.pipeline_mode<synchronous>, transform_indices = @transform_2, window_bounds = array<i64: 4, 8>}, {pipeline_mode = #tpu.pipeline_mode<synchronous>, transform_indices = @transform_3, window_bounds = array<i64: 4, 4>}, {transform_indices = @transform_4, window_bounds = array<i64: 1, 4, 256>}]} {
    %c0 = arith.constant 0 : index
    %c0_0 = arith.constant 0 : index
    %c0_1 = arith.constant 0 : index
    %0 = vector.load %arg2[%c0, %c0_0, %c0_1] : memref<1x4x256xf32, #tpu.memory_space<vmem>>, vector<1x4x256xf32>
    %1 = vector.shape_cast %0 : vector<1x4x256xf32> to vector<4x256xf32>
    %c0_2 = arith.constant 0 : index
    %c0_3 = arith.constant 0 : index
    %c0_4 = arith.constant 0 : index
    %2 = vector.load %arg3[%c0_2, %c0_3, %c0_4] : memref<1x8x256xf32, #tpu.memory_space<vmem>>, vector<1x8x256xf32>
    %3 = vector.shape_cast %2 : vector<1x8x256xf32> to vector<8x256xf32>
    %c0_5 = arith.constant 0 : index
    %c0_6 = arith.constant 0 : index
    %4 = vector.load %arg4[%c0_5, %c0_6] : memref<4x8xf32, #tpu.memory_space<vmem>>, vector<4x8xf32>
    %cst = arith.constant dense<0.000000e+00> : vector<4x256xf32>
    %5 = tpu.matmul %4, %3, %cst {dimension_numbers = #tpu.dot_dimension_numbers<[1], [0], [0], [1], [0, 0, 1, 1], [], []>} : vector<4x8xf32>, vector<8x256xf32>, vector<4x256xf32> -> vector<4x256xf32>
    %c0_7 = arith.constant 0 : index
    %c0_8 = arith.constant 0 : index
    %6 = vector.load %arg5[%c0_7, %c0_8] : memref<4x4xf32, #tpu.memory_space<vmem>>, vector<4x4xf32>
    %cst_9 = arith.constant dense<0.000000e+00> : vector<4x256xf32>
    %7 = tpu.matmul %6, %1, %cst_9 {dimension_numbers = #tpu.dot_dimension_numbers<[1], [0], [0], [1], [0, 0, 1, 1], [], []>} : vector<4x4xf32>, vector<4x256xf32>, vector<4x256xf32> -> vector<4x256xf32>
    %8 = arith.addf %5, %7 : vector<4x256xf32>
    %9 = arith.negf %8 : vector<4x256xf32>
    %10 = math.exp %9 : vector<4x256xf32>
    %cst_10 = arith.constant 1.000000e+00 : f32
    %11 = vector.broadcast %cst_10 : f32 to vector<4x256xf32>
    %12 = arith.addf %11, %10 : vector<4x256xf32>
    %13 = arith.divf %11, %12 : vector<4x256xf32>
    %14 = arith.mulf %1, %13 : vector<4x256xf32>
    %c0_11 = arith.constant 0 : index
    %c0_12 = arith.constant 0 : index
    %c0_13 = arith.constant 0 : index
    %15 = vector.load %arg6[%c0_11, %c0_12, %c0_13] : memref<1x4x256xf32, #tpu.memory_space<vmem>>, vector<1x4x256xf32>
    %16 = vector.shape_cast %15 : vector<1x4x256xf32> to vector<4x256xf32>
    %17 = vector.shape_cast %14 : vector<4x256xf32> to vector<1x4x256xf32>
    tpu.vector_store %arg6[%c0_11, %c0_12, %c0_13], %17 {strides = array<i32>} : memref<1x4x256xf32, #tpu.memory_space<vmem>>, vector<1x4x256xf32>,
    return
  }
  func.func @transform_0(%arg0: i32, %arg1: i32) -> (i32, i32, i32) {
    %c0_i32 = arith.constant 0 : i32
    %c0_i32_0 = arith.constant 0 : i32
    return %arg0, %c0_i32, %arg1 : i32, i32, i32
  }
  func.func @transform_1(%arg0: i32, %arg1: i32) -> (i32, i32, i32) {
    %c0_i32 = arith.constant 0 : i32
    %c0_i32_0 = arith.constant 0 : i32
    return %arg0, %c0_i32, %arg1 : i32, i32, i32
  }
  func.func @transform_2(%arg0: i32, %arg1: i32) -> (i32, i32) {
    %c0_i32 = arith.constant 0 : i32
    %c0_i32_0 = arith.constant 0 : i32
    %c0_i32_1 = arith.constant 0 : i32
    return %c0_i32, %c0_i32_0 : i32, i32
  }
  func.func @transform_3(%arg0: i32, %arg1: i32) -> (i32, i32) {
    %c0_i32 = arith.constant 0 : i32
    %c0_i32_0 = arith.constant 0 : i32
    %c0_i32_1 = arith.constant 0 : i32
    return %c0_i32, %c0_i32_0 : i32, i32
  }
  func.func @transform_4(%arg0: i32, %arg1: i32) -> (i32, i32, i32) {
    %c0_i32 = arith.constant 0 : i32
    %c0_i32_0 = arith.constant 0 : i32
    return %arg0, %c0_i32, %arg1 : i32, i32, i32
  }
}

</mosaic_0001>

<llo_original>
// kernel: tpu_custom_call.1
$region0: #{tpu_custom_call.1}
  #allocation0 [shape = 'u32[]', space=smem, size = 0x4, offset = 0x4, fixed_abs, tag = 'smem constant byte address 0x4 - core index']
  #allocation1 [shape = 'u32[144,128]{1,0:T(1,128)}', space=vmem, size = 0x12000, scoped, tag = 'internal scratch']
  %s0 = inlined_call_operand.hbm [shape: f32[2,4,256], index: 0, kind: input, shape index: {}]
  %s1 = inlined_call_operand.hbm [shape: f32[2,8,256], index: 1, kind: input, shape index: {}]
  %s2 = inlined_call_operand.hbm [shape: f32[4,8], index: 2, kind: input, shape index: {}]
  %s3 = inlined_call_operand.vmem [shape: f32[4,4], index: 3, kind: input, shape index: {}]
  %s4 = inlined_call_operand.hbm [shape: f32[2,4,256], index: 4, kind: output, shape index: {}]
  %s5 = sld [smem:[#allocation0]]
  $region61: #{tpu_custom_call.1} parent=0
    _
  %s7 = ssub.s32 1, %s5
  %s8 = scalar_select 0, %s7, %s5
  $region1: #{tpu_custom_call.1} parent=0
    #allocation2 [shape = 'u8[8192]{0}', space=vmem, size = 0x2000, scoped, tag = 'input window, operand 0']
    #allocation3 [shape = 's32[2]{0}', space=sflag, size = 0x8, scoped, tag = 'scoped memory for tpu_custom_call.1']
    #allocation4 [shape = 's32[2]{0}', space=sflag, size = 0x8, scoped, tag = 'scoped memory for tpu_custom_call.1']
    #allocation5 [shape = 'u8[16384]{0}', space=vmem, size = 0x4000, scoped, tag = 'input window, operand 1']
    #allocation6 [shape = 's32[2]{0}', space=sflag, size = 0x8, scoped, tag = 'scoped memory for tpu_custom_call.1']
    #allocation7 [shape = 'u8[2048]{0}', space=vmem, size = 0x800, scoped, tag = 'input window, operand 2, single buffered']
    #allocation8 [shape = 'u8[8192]{0}', space=vmem, size = 0x2000, scoped, tag = 'output window, operand 0']
    %9 = vsyncpa [#allocation3], 0
    %s10 = scalar_lea.sflag [#allocation3], 1
    %11 = vsyncpa %s10, 0
    %12 = vsyncpa [#allocation6], 0
    %s13 = scalar_lea.sflag [#allocation6], 1
    %14 = vsyncpa %s13, 0
    %15 = vsyncpa [#allocation4], 0
    %s16 = scalar_lea.sflag [#allocation4], 1
    %17 = vsyncpa %s16, 0
    loop: start=0, step=1, limit=4
    $region2: #{tpu_custom_call.1} parent=1 // loop_pre_header
      _
    $region3: #{tpu_custom_call.1} parent=1 // loop_header
      %s19 = sphi 0, %s23
      %p20 = scmp.ge.s32.totalorder %s19, 4
      %s26 = sphi 0, %s38
      %s27 = sphi 0, %s34
      %s28 = sphi 0, %s26
      %s29 = sphi 0, %s27
      %s30 = sphi 0, %s28
      %s31 = sphi 0, %s29
      %s43 = sphi 0, %s45
      %s46 = sphi 0, %s43
      %s47 = sphi 0, %s46
      %s63 = sphi 0, %s47
      %s71 = sphi 0, %s73
      %s74 = sphi 0, %s71
      %s75 = sphi 0, %s74
      %s91 = sphi 0, %s75
      %s95 = sphi 0, %s95
      %s97 = sphi 0, %s95
      %s98 = sphi 0, %s97
      %s112 = sphi 0, %s98
      %s116 = sphi 0, %s116
      %s118 = sphi 0, %s116
      %s119 = sphi 0, %s118
      %s133 = sphi 0, %s119
      %s141 = sphi 0, %s143
      %s144 = sphi 0, %s141
      %s145 = sphi 0, %s144
      %s161 = sphi 0, %s145
    $region4: #{tpu_custom_call.1} parent=1 // loop_header_branch
      %22 = sbr.rel (%p20) target = $region8
    $region5: #{tpu_custom_call.1} parent=1 // loop_body
      %s24 = ssub.s32 %s19, 1
      %s25 = ssub.s32 %s19, 2
      %s32 = sadd.s32 1, %s27
      %p33 = scmp.ge.s32.totalorder %s32, 1
      %s34 = scalar_select %p33, 0, %s32
      %s35 = sadd.s32 1, %s26
      %s36 = scalar_select %p33, %s35, %s26
      %p37 = scmp.ge.s32.totalorder %s36, 2
      %s38 = scalar_select %p37, 0, %s36
      %s39 = ssub.s32 %s26, %s38
      %s40 = ssub.s32 %s27, %s34
      %s41 = sor.u32 %s39, %s40
      %p42 = scmp.eq.s32.totalorder %s41, 0
      %s44 = sadd.s32 %s43, 1
      %s45 = scalar_select %p42, %s43, %s44
      %p48 = pneg %p42
      %p49 = scmp.eq.s32.totalorder %s19, 1
      %p50 = por %p48, %p49
      %p51 = scmp.ne.s32.totalorder %s43, %s46
      %p52 = scmp.eq.s32.totalorder %s19, 0
      %p53 = por %p51, %p52
      %p54 = scmp.ne.s32.totalorder %s43, %s46
      %p55 = scmp.eq.s32.totalorder %s24, 1
      %p56 = por %p54, %p55
      %p57 = scmp.ne.s32.totalorder %s46, %s47
      %p58 = scmp.eq.s32.totalorder %s24, 0
      %p59 = por %p57, %p58
      %p60 = scmp.ne.s32.totalorder %s46, %s47
      %p61 = scmp.eq.s32.totalorder %s25, 1
      %p62 = por %p60, %p61
      %p64 = scmp.ne.s32.totalorder %s47, %s63
      %p65 = scmp.eq.s32.totalorder %s25, 0
      %p66 = por %p64, %p65
      %s67 = ssub.s32 %s26, %s38
      %s68 = ssub.s32 %s27, %s34
      %s69 = sor.u32 %s67, %s68
      %p70 = scmp.eq.s32.totalorder %s69, 0
      %s72 = sadd.s32 %s71, 1
      %s73 = scalar_select %p70, %s71, %s72
      %p76 = pneg %p70
      %p77 = scmp.eq.s32.totalorder %s19, 1
      %p78 = por %p76, %p77
      %p79 = scmp.ne.s32.totalorder %s71, %s74
      %p80 = scmp.eq.s32.totalorder %s19, 0
      %p81 = por %p79, %p80
      %p82 = scmp.ne.s32.totalorder %s71, %s74
      %p83 = scmp.eq.s32.totalorder %s24, 1
      %p84 = por %p82, %p83
      %p85 = scmp.ne.s32.totalorder %s74, %s75
      %p86 = scmp.eq.s32.totalorder %s24, 0
      %p87 = por %p85, %p86
      %p88 = scmp.ne.s32.totalorder %s74, %s75
      %p89 = scmp.eq.s32.totalorder %s25, 1
      %p90 = por %p88, %p89
      %p92 = scmp.ne.s32.totalorder %s75, %s91
      %p93 = scmp.eq.s32.totalorder %s25, 0
      %p94 = por %p92, %p93
      %s96 = sadd.s32 %s95, 1
      %p99 = scmp.eq.s32.totalorder %s19, 1
      %p100 = scmp.ne.s32.totalorder %s95, %s97
      %p101 = scmp.eq.s32.totalorder %s19, 0
      %p102 = por %p100, %p101
      %p103 = scmp.ne.s32.totalorder %s95, %s97
      %p104 = scmp.eq.s32.totalorder %s24, 1
      %p105 = por %p103, %p104
      %p106 = scmp.ne.s32.totalorder %s97, %s98
      %p107 = scmp.eq.s32.totalorder %s24, 0
      %p108 = por %p106, %p107
      %p109 = scmp.ne.s32.totalorder %s97, %s98
      %p110 = scmp.eq.s32.totalorder %s25, 1
      %p111 = por %p109, %p110
      %p113 = scmp.ne.s32.totalorder %s98, %s112
      %p114 = scmp.eq.s32.totalorder %s25, 0
      %p115 = por %p113, %p114
      %s117 = sadd.s32 %s116, 1
      %p120 = scmp.eq.s32.totalorder %s19, 1
      %p121 = scmp.ne.s32.totalorder %s116, %s118
      %p122 = scmp.eq.s32.totalorder %s19, 0
      %p123 = por %p121, %p122
      %p124 = scmp.ne.s32.totalorder %s116, %s118
      %p125 = scmp.eq.s32.totalorder %s24, 1
      %p126 = por %p124, %p125
      %p127 = scmp.ne.s32.totalorder %s118, %s119
      %p128 = scmp.eq.s32.totalorder %s24, 0
      %p129 = por %p127, %p128
      %p130 = scmp.ne.s32.totalorder %s118, %s119
      %p131 = scmp.eq.s32.totalorder %s25, 1
      %p132 = por %p130, %p131
      %p134 = scmp.ne.s32.totalorder %s119, %s133
      %p135 = scmp.eq.s32.totalorder %s25, 0
      %p136 = por %p134, %p135
      %s137 = ssub.s32 %s26, %s38
      %s138 = ssub.s32 %s27, %s34
      %s139 = sor.u32 %s137, %s138
      %p140 = scmp.eq.s32.totalorder %s139, 0
      %s142 = sadd.s32 %s141, 1
      %s143 = scalar_select %p140, %s141, %s142
      %p146 = pneg %p140
      %p147 = scmp.eq.s32.totalorder %s19, 1
      %p148 = por %p146, %p147
      %p149 = scmp.ne.s32.totalorder %s141, %s144
      %p150 = scmp.eq.s32.totalorder %s19, 0
      %p151 = por %p149, %p150
      %p152 = scmp.ne.s32.totalorder %s141, %s144
      %p153 = scmp.eq.s32.totalorder %s24, 1
      %p154 = por %p152, %p153
      %p155 = scmp.ne.s32.totalorder %s144, %s145
      %p156 = scmp.eq.s32.totalorder %s24, 0
      %p157 = por %p155, %p156
      %p158 = scmp.ne.s32.totalorder %s144, %s145
      %p159 = scmp.eq.s32.totalorder %s25, 1
      %p160 = por %p158, %p159
      %p162 = scmp.ne.s32.totalorder %s145, %s161
      %p163 = scmp.eq.s32.totalorder %s25, 0
      %p164 = por %p162, %p163
      %p165 = scmp.le.s32.totalorder 1, %s19
      %p166 = scmp.lt.s32.totalorder %s19, 3
      %p167 = pnand %p165, %p166
      %p168 = pneg %p167
      // Predicated region
      $region9: #{tpu_custom_call.1} parent=5 // pred_check
        _
      $region10: #{tpu_custom_call.1} parent=5 // pred_check_branch
        %170 = sbr.rel (%p167) target = $region12
      $region11: #{tpu_custom_call.1} parent=5 // pred_region
        %s171 = ssub.s32 %s19, 1
        // Predicated region
        $region13: #{tpu_custom_call.1} parent=11 // pred_check
          %p172 = pneg %p108
        $region14: #{tpu_custom_call.1} parent=11 // pred_check_branch
          %174 = sbr.rel (%p172) target = $region16
        $region15: #{tpu_custom_call.1} parent=11 // pred_region
          %s176 = ssub.s32 64, 64
          %177 = vsyncadd [#allocation6], %s176
          %s179 = sshll.u32 [#allocation7], 4
          %s180 = int_to_ptr.vmem [resolvable:$true] %s179
          %182 = dma.hbm_to_vmem [thread:$0]  %s2, 64, %s180, [#allocation6]
        $region16: #{tpu_custom_call.1} parent=11 // pred_fallthru
          _
        // Predicated region
        $region17: #{tpu_custom_call.1} parent=11 // pred_check
          %p183 = pneg %p129
        $region18: #{tpu_custom_call.1} parent=11 // pred_check_branch
          %185 = sbr.rel (%p183) target = $region20
        $region19: #{tpu_custom_call.1} parent=11 // pred_region
          _
        $region20: #{tpu_custom_call.1} parent=11 // pred_fallthru
          _
      $region12: #{tpu_custom_call.1} parent=5 // pred_fallthru
        _
      %p186 = scmp.lt.s32.totalorder %s19, 2
      // Predicated region
      $region21: #{tpu_custom_call.1} parent=5 // pred_check
        %p187 = pneg %p186
      $region22: #{tpu_custom_call.1} parent=5 // pred_check_branch
        %189 = sbr.rel (%p187) target = $region24
      $region23: #{tpu_custom_call.1} parent=5 // pred_region
        // Predicated region
        $region25: #{tpu_custom_call.1} parent=23 // pred_check
          %p190 = pneg %p53
        $region26: #{tpu_custom_call.1} parent=23 // pred_check_branch
          %192 = sbr.rel (%p190) target = $region28
        $region27: #{tpu_custom_call.1} parent=23 // pred_region
          %s193 = sand.u32 %s43, 1
          %s194 = scalar_lea.sflag [#allocation3], %s193
          %s195 = sand.u32 %s43, 1
          %s196 = smul.addr %s195, 8
          %s197 = scalar_lea.vmem [#allocation2], %s196
          %s198 = smul.u32 2, %s27
          %s200 = ssub.s32 128, 128
          %201 = vsyncadd %s194, %s200
          %s202 = smul.addr %s26, 2
          %s203 = sadd.s32 %s198, %s202
          %s204 = smul.addr %s203, 64
          %s205 = scalar_lea.hbm %s0, %s204
          %s207 = sshll.u32 %s197, 4
          %s208 = int_to_ptr.vmem [resolvable:$true] %s207
          %210 = dma.hbm_to_vmem [thread:$0]  %s205, 128, %s208, %s194
        $region28: #{tpu_custom_call.1} parent=23 // pred_fallthru
          _
        // Predicated region
        $region29: #{tpu_custom_call.1} parent=23 // pred_check
          %p211 = pneg %p81
        $region30: #{tpu_custom_call.1} parent=23 // pred_check_branch
          %213 = sbr.rel (%p211) target = $region32
        $region31: #{tpu_custom_call.1} parent=23 // pred_region
          %s214 = sand.u32 %s19, 1
          %s215 = scalar_lea.sflag [#allocation6], %s214
          %s216 = sand.u32 %s71, 1
          %s217 = smul.addr %s216, 16
          %s218 = scalar_lea.vmem [#allocation5], %s217
          %s219 = smul.u32 2, %s27
          %s221 = ssub.s32 256, 256
          %222 = vsyncadd %s215, %s221
          %s223 = smul.addr %s26, 2
          %s224 = sadd.s32 %s219, %s223
          %s225 = smul.addr %s224, 128
          %s226 = scalar_lea.hbm %s1, %s225
          %s228 = sshll.u32 %s218, 4
          %s229 = int_to_ptr.vmem [resolvable:$true] %s228
          %231 = dma.hbm_to_vmem [thread:$0]  %s226, 256, %s229, %s215
        $region32: #{tpu_custom_call.1} parent=23 // pred_fallthru
          _
      $region24: #{tpu_custom_call.1} parent=5 // pred_fallthru
        _
      %p232 = scmp.le.s32.totalorder 1, %s19
      %p233 = scmp.lt.s32.totalorder %s19, 3
      %p234 = pnand %p232, %p233
      %p235 = pneg %p234
      // Predicated region
      $region33: #{tpu_custom_call.1} parent=5 // pred_check
        _
      $region34: #{tpu_custom_call.1} parent=5 // pred_check_branch
        %237 = sbr.rel (%p234) target = $region36
      $region35: #{tpu_custom_call.1} parent=5 // pred_region
        %s238 = ssub.s32 %s19, 1
        %s239 = sand.u32 %s46, 1
        %s240 = scalar_lea.sflag [#allocation3], %s239
        %s241 = sand.u32 %s46, 1
        %s242 = smul.addr %s241, 8
        %s243 = scalar_lea.vmem [#allocation2], %s242
        // Predicated region
        $region37: #{tpu_custom_call.1} parent=35 // pred_check
          %p244 = pneg %p59
        $region38: #{tpu_custom_call.1} parent=35 // pred_check_branch
          %246 = sbr.rel (%p244) target = $region40
        $region39: #{tpu_custom_call.1} parent=35 // pred_region
          %247 = dma.done %s240, 128
        $region40: #{tpu_custom_call.1} parent=35 // pred_fallthru
          _
        %s248 = sand.u32 %s24, 1
        %s249 = scalar_lea.sflag [#allocation6], %s248
        %s250 = sand.u32 %s74, 1
        %s251 = smul.addr %s250, 16
        %s252 = scalar_lea.vmem [#allocation5], %s251
        // Predicated region
        $region41: #{tpu_custom_call.1} parent=35 // pred_check
          %p253 = pneg %p87
        $region42: #{tpu_custom_call.1} parent=35 // pred_check_branch
          %255 = sbr.rel (%p253) target = $region44
        $region43: #{tpu_custom_call.1} parent=35 // pred_region
          %256 = dma.done %s249, 256
        $region44: #{tpu_custom_call.1} parent=35 // pred_fallthru
          _
        // Predicated region
        $region45: #{tpu_custom_call.1} parent=35 // pred_check
          %p257 = pneg %p108
        $region46: #{tpu_custom_call.1} parent=35 // pred_check_branch
          %259 = sbr.rel (%p257) target = $region48
        $region47: #{tpu_custom_call.1} parent=35 // pred_region
          %260 = dma.done [#allocation6], 64
        $region48: #{tpu_custom_call.1} parent=35 // pred_fallthru
          _
        %s261 = sand.u32 %s46, 1
        %s262 = scalar_lea.sflag [#allocation3], %s261
        %s263 = sand.u32 %s46, 1
        %s264 = smul.addr %s263, 8
        %s265 = scalar_lea.vmem [#allocation2], %s264
        %p266 = pneg %p59
        %p267 = pneg %p56
        %s268 = sand.u32 %s24, 1
        %s269 = scalar_lea.sflag [#allocation6], %s268
        %s270 = sand.u32 %s74, 1
        %s271 = smul.addr %s270, 16
        %s272 = scalar_lea.vmem [#allocation5], %s271
        %p273 = pneg %p87
        %p274 = pneg %p84
        %p275 = pneg %p108
        %p276 = pneg %p105
        %p277 = pneg %p129
        %p278 = pneg %p126
        %p279 = pneg %p157
        %p280 = pneg %p154
        %s281 = sand.u32 %s144, 1
        %s282 = scalar_lea.sflag [#allocation4], %s281
        %s283 = sand.u32 %s144, 1
        %s284 = smul.addr %s283, 8
        %s285 = scalar_lea.vmem [#allocation8], %s284
        %s286 = smul.u32 2, %s29
        %s287 = smul.u32 2, %s29
        %s288 = smul.u32 2, %s29
        %v289 = vld [vmem:[%s243] sm:$0xff]
        %v290 = vld [vmem:[%s252] sm:$0xff]
        %v291 = vld [vmem:[%s252 + $0x8] sm:$0xff]
        %v292 = vld [vmem:[#allocation7] sm:$0xf]
        %v293 = vld [vmem:[%s3] sm:$0xf]
        %v295 = vcombine.high %v289, %v289
        %vm296 = vcmask 31744
        %v298 = vsel %vm296, %v293, 0
        %vm300 = vcmask 1043456
        %v301 = vsel %vm300, %v289, 0
        %v303 = vsel %vm300, %v295, 0
        %305 = vmatprep.subr.mxu0 0.0
        %306 = vmatpush1.msra.mxu0 0.0
        %307 = vmatprep.subr.mxu0 0.0
        %308 = vmatpush1.msra.mxu0 0.0
        %309 = vmatprep.subr.mxu0 0.0
        %310 = vmatpush1.msra.mxu0 0.0
        %311 = vmatprep.subr.mxu0 0.0
        %312 = vmatpush1.msra.mxu0 0.0
        %313 = vmatprep.subr.mxu0 0.0
        %314 = vmatpush1.msra.mxu0 0.0
        %315 = vmatprep.subr.mxu0 0.0
        %316 = vmatpush1.msra.mxu0 0.0
        %317 = vmatprep.subr.mxu0 0.0
        %318 = vmatpush1.msra.mxu0 0.0
        %319 = vmatprep.subr.mxu0 0.0
        %320 = vmatpush1.msra.mxu0 0.0
        %321 = vmatprep.subr.mxu0 0.0
        %322 = vmatpush1.msra.mxu0 0.0
        %323 = vmatprep.subr.mxu0 0.0
        %324 = vmatpush1.msra.mxu0 0.0
        %325 = vmatprep.subr.mxu0 0.0
        %326 = vmatpush1.msra.mxu0 0.0
        %327 = vmatprep.subr.mxu0 0.0
        %328 = vmatpush1.msra.mxu0 0.0
        %329 = vmatprep.subr.mxu0 0.0
        %330 = vmatpush1.msra.mxu0 0.0
        %331 = vmatprep.subr.mxu0 0.0
        %332 = vmatpush1.msra.mxu0 0.0
        %333 = vmatprep.subr.mxu0 0.0
        %334 = vmatpush1.msra.mxu0 0.0
        %335 = vmatprep.subr.mxu0 %v303
        %336 = vmatpush1.msra.mxu0 %v301
        %337 = vmatprep.subr.mxu0 0.0
        %338 = vmatpush2.msra.mxu0 0.0
        %339 = vmatprep.subr.mxu0 0.0
        %340 = vmatpush2.msra.mxu0 0.0
        %341 = vmatprep.subr.mxu0 0.0
        %342 = vmatpush2.msra.mxu0 0.0
        %343 = vmatprep.subr.mxu0 0.0
        %344 = vmatpush2.msra.mxu0 0.0
        %345 = vmatprep.subr.mxu0 0.0
        %346 = vmatpush2.msra.mxu0 0.0
        %347 = vmatprep.subr.mxu0 0.0
        %348 = vmatpush2.msra.mxu0 0.0
        %349 = vmatprep.subr.mxu0 0.0
        %350 = vmatpush2.msra.mxu0 0.0
        %351 = vmatprep.subr.mxu0 0.0
        %352 = vmatpush2.msra.mxu0 0.0
        %353 = vmatprep.subr.mxu0 0.0
        %354 = vmatpush2.msra.mxu0 0.0
        %355 = vmatprep.subr.mxu0 0.0
        %356 = vmatpush2.msra.mxu0 0.0
        %357 = vmatprep.subr.mxu0 0.0
        %358 = vmatpush2.msra.mxu0 0.0
        %359 = vmatprep.subr.mxu0 0.0
        %360 = vmatpush2.msra.mxu0 0.0
        %361 = vmatprep.subr.mxu0 0.0
        %362 = vmatpush2.msra.mxu0 0.0
        %363 = vmatprep.subr.mxu0 0.0
        %364 = vmatpush2.msra.mxu0 0.0
        %365 = vmatprep.subr.mxu0 0.0
        %366 = vmatpush2.msra.mxu0 0.0
        %367 = vmatprep.subr.mxu0 0.0
        %368 = vmatpush2.msra.mxu0 0.0
        %369 = vmatprep.mubr.f32.mxu0 0.0
        %370 = vmatmul.mubr.f32.gmra.mxu0 %v298
        %v371 = vpop.f32.mrf.mxu0
        %v372 = vadd.f32 0.0, %v371
        %v373 = vpop.f32.mrf.mxu0
        %v374 = vadd.f32 0.0, %v373
        %375 = vdwg.mxu0
        %vm376 = vcmask 64512
        %v378 = vsel %vm376, %v292, 0
        %380 = vmatprep.subr.mxu0 0.0
        %381 = vmatpush1.msra.mxu0 0.0
        %382 = vmatprep.subr.mxu0 0.0
        %383 = vmatpush1.msra.mxu0 0.0
        %384 = vmatprep.subr.mxu0 0.0
        %385 = vmatpush1.msra.mxu0 0.0
        %386 = vmatprep.subr.mxu0 0.0
        %387 = vmatpush1.msra.mxu0 0.0
        %388 = vmatprep.subr.mxu0 0.0
        %389 = vmatpush1.msra.mxu0 0.0
        %390 = vmatprep.subr.mxu0 0.0
        %391 = vmatpush1.msra.mxu0 0.0
        %392 = vmatprep.subr.mxu0 0.0
        %393 = vmatpush1.msra.mxu0 0.0
        %394 = vmatprep.subr.mxu0 0.0
        %395 = vmatpush1.msra.mxu0 0.0
        %396 = vmatprep.subr.mxu0 0.0
        %397 = vmatpush1.msra.mxu0 0.0
        %398 = vmatprep.subr.mxu0 0.0
        %399 = vmatpush1.msra.mxu0 0.0
        %400 = vmatprep.subr.mxu0 0.0
        %401 = vmatpush1.msra.mxu0 0.0
        %402 = vmatprep.subr.mxu0 0.0
        %403 = vmatpush1.msra.mxu0 0.0
        %404 = vmatprep.subr.mxu0 0.0
        %405 = vmatpush1.msra.mxu0 0.0
        %406 = vmatprep.subr.mxu0 0.0
        %407 = vmatpush1.msra.mxu0 0.0
        %408 = vmatprep.subr.mxu0 0.0
        %409 = vmatpush1.msra.mxu0 0.0
        %410 = vmatprep.subr.mxu0 %v291
        %411 = vmatpush1.msra.mxu0 %v290
        %412 = vmatprep.subr.mxu0 0.0
        %413 = vmatpush2.msra.mxu0 0.0
        %414 = vmatprep.subr.mxu0 0.0
        %415 = vmatpush2.msra.mxu0 0.0
        %416 = vmatprep.subr.mxu0 0.0
        %417 = vmatpush2.msra.mxu0 0.0
        %418 = vmatprep.subr.mxu0 0.0
        %419 = vmatpush2.msra.mxu0 0.0
        %420 = vmatprep.subr.mxu0 0.0
        %421 = vmatpush2.msra.mxu0 0.0
        %422 = vmatprep.subr.mxu0 0.0
        %423 = vmatpush2.msra.mxu0 0.0
        %424 = vmatprep.subr.mxu0 0.0
        %425 = vmatpush2.msra.mxu0 0.0
        %426 = vmatprep.subr.mxu0 0.0
        %427 = vmatpush2.msra.mxu0 0.0
        %428 = vmatprep.subr.mxu0 0.0
        %429 = vmatpush2.msra.mxu0 0.0
        %430 = vmatprep.subr.mxu0 0.0
        %431 = vmatpush2.msra.mxu0 0.0
        %432 = vmatprep.subr.mxu0 0.0
        %433 = vmatpush2.msra.mxu0 0.0
        %434 = vmatprep.subr.mxu0 0.0
        %435 = vmatpush2.msra.mxu0 0.0
        %436 = vmatprep.subr.mxu0 0.0
        %437 = vmatpush2.msra.mxu0 0.0
        %438 = vmatprep.subr.mxu0 0.0
        %439 = vmatpush2.msra.mxu0 0.0
        %440 = vmatprep.subr.mxu0 0.0
        %441 = vmatpush2.msra.mxu0 0.0
        %442 = vmatprep.subr.mxu0 0.0
        %443 = vmatpush2.msra.mxu0 0.0
        %444 = vmatprep.mubr.f32.mxu0 0.0
        %445 = vmatmul.mubr.f32.gmra.mxu0 %v378
        %v446 = vpop.f32.mrf.mxu0
        %v447 = vadd.f32 %v372, %v446
        %v448 = vpop.f32.mrf.mxu0
        %v449 = vadd.f32 %v374, %v448
        %450 = vdwg.mxu0
        %v451 = vxor.u32 %v447, 2147483648
        %v452 = vxor.u32 %v449, 2147483648
        %v453 = vmul.f32 %v451, 1.442695
        %v454 = vpow.pop %v453
        %v455 = vmul.f32 %v452, 1.442695
        %v456 = vpow.pop %v455
        %v457 = vadd.f32 %v454, 1.0
        %v458 = vadd.f32 %v456, 1.0
        %v459 = vrcp.pop %v457
        %v460 = vmul.f32 1.0, %v459
        %v461 = vrcp.pop %v458
        %v462 = vmul.f32 1.0, %v461
        %v465 = vcombine.low %v460, %v462
        %v467 = vmul.f32 %v289, %v465
        %468 = vst [vmem:[%s285] sm:$0xff] %v467
        %s469 = sand.u32 %s144, 1
        %s470 = scalar_lea.sflag [#allocation4], %s469
        %s471 = sand.u32 %s144, 1
        %s472 = smul.addr %s471, 8
        %s473 = scalar_lea.vmem [#allocation8], %s472
        // Predicated region
        $region49: #{tpu_custom_call.1} parent=35 // pred_check
          %p474 = pneg %p154
        $region50: #{tpu_custom_call.1} parent=35 // pred_check_branch
          %476 = sbr.rel (%p474) target = $region52
        $region51: #{tpu_custom_call.1} parent=35 // pred_region
          %s477 = smul.u32 2, %s29
          %s479 = ssub.s32 128, 128
          %480 = vsyncadd %s470, %s479
          %s481 = smul.addr %s28, 2
          %s482 = sadd.s32 %s477, %s481
          %s483 = smul.addr %s482, 64
          %s484 = scalar_lea.hbm %s4, %s483
          %s486 = sshll.u32 %s473, 4
          %s487 = int_to_ptr.vmem [resolvable:$true] %s486
          %489 = dma.vmem_to_hbm [thread:$0]  %s487, 128, %s484, %s470
        $region52: #{tpu_custom_call.1} parent=35 // pred_fallthru
          _
      $region36: #{tpu_custom_call.1} parent=5 // pred_fallthru
        _
      %p490 = scmp.le.s32.totalorder 2, %s19
      // Predicated region
      $region53: #{tpu_custom_call.1} parent=5 // pred_check
        %p491 = pneg %p490
      $region54: #{tpu_custom_call.1} parent=5 // pred_check_branch
        %493 = sbr.rel (%p491) target = $region56
      $region55: #{tpu_custom_call.1} parent=5 // pred_region
        %s494 = ssub.s32 %s19, 2
        // Predicated region
        $region57: #{tpu_custom_call.1} parent=55 // pred_check
          %p495 = pneg %p160
        $region58: #{tpu_custom_call.1} parent=55 // pred_check_branch
          %497 = sbr.rel (%p495) target = $region60
        $region59: #{tpu_custom_call.1} parent=55 // pred_region
          %s498 = sand.u32 %s145, 1
          %s499 = scalar_lea.sflag [#allocation4], %s498
          %s500 = sand.u32 %s145, 1
          %s501 = smul.addr %s500, 8
          %s502 = scalar_lea.vmem [#allocation8], %s501
          %503 = dma.done %s499, 128
        $region60: #{tpu_custom_call.1} parent=55 // pred_fallthru
          _
      $region56: #{tpu_custom_call.1} parent=5 // pred_fallthru
        _
    $region6: #{tpu_custom_call.1} parent=1 // loop_footer
      %s23 = sadd.s32 1, %s19
    $region7: #{tpu_custom_call.1} parent=1 // loop_footer_branch
      %18 = sbr.rel target = $region3
    $region8: #{tpu_custom_call.1} parent=1 // loop_exit
      _
    %504 = vsyncpa [#allocation3], 1
    %s505 = scalar_lea.sflag [#allocation3], 1
    %506 = vsyncpa %s505, 1
    %507 = vsyncpa [#allocation6], 1
    %s508 = scalar_lea.sflag [#allocation6], 1
    %509 = vsyncpa %s508, 1
    %510 = vsyncpa [#allocation4], 1
    %s511 = scalar_lea.sflag [#allocation4], 1
    %512 = vsyncpa %s511, 1

</llo_original>
